<compile_context>
chip_gen: v6e
topology: v6e:2x2x1
jax: 0.10.0
libtpu: 0.0.40
codegen_flags: <defaults>
</compile_context>

<pallas_src>
import jax
import jax.numpy as jnp
from jax.experimental import pallas as pl
from jax.experimental.pallas import tpu as pltpu


def automaton_kernel(x_ref, y0_ref, pr_ref, e_ref, acc_ref, out_ref, xexp_ref):
    # x_ref:    (Bt, T, S)     input symbol weights (native layout)
    # y0_ref:   (1, S*N)       y0[s*N+m] = sum_n start[n] * P[s,n,m]
    # pr_ref:   (S*N, S*N)     PR[s*N+n, s'*N+m] = P[s', n, m]
    # e_ref:    (S, S*N)       E[s', s*N+m] = 1 if s' == s else 0
    # acc_ref:  (S*N, C)       accept_states tiled S times along rows
    # out_ref:  (Bt, C)        class probabilities
    # xexp_ref: (Bt, T, S*N)   VMEM scratch: expanded symbols for all steps
    Bt, T, S = x_ref.shape
    SN = pr_ref.shape[0]

    # --- Symbol expansion for ALL timesteps in one MXU matmul, off the
    # recurrence's critical path; results live in VMEM, not vregs. ---
    e = e_ref[...]
    if T % 8 == 0:
        # (Bt, T, S) -> (Bt*T, S) and back are layout-free when T is a whole
        # number of sublane tiles.
        x_all = x_ref[...].reshape(Bt * T, S)
        xexp_ref[...] = jnp.dot(
            x_all, e, preferred_element_type=jnp.float32).reshape(Bt, T, SN)
    else:
        # Fallback: per-timestep expansion, still issued before the recurrence.
        for t in range(T):
            xexp_ref[:, t, :] = jnp.dot(
                x_ref[:, t, :], e, preferred_element_type=jnp.float32)

    pr = pr_ref[...]                                     # hoisted constant load
    y = jnp.broadcast_to(y0_ref[...], (Bt, SN))          # y_0 over batch tile

    # Fully unrolled recurrence (T is a small static trip count): one
    # critical-path MXU matmul per step.
    # TODO(synk): hold `pr` in MXU weight registers across steps
    # (pltpu.matmul_push_rhs / matmul_acc_lhs / matmul_pop) once the SN->128
    # lane padding is explicitly zeroed.
    w = xexp_ref[:, 0, :] * y
    for t in range(1, T):
        y = jnp.dot(w, pr, preferred_element_type=jnp.float32)
        w = xexp_ref[:, t, :] * y

    # Final contraction folds both the s-reduction and accept_states.
    out_ref[...] = jnp.dot(w, acc_ref[...], preferred_element_type=jnp.float32)


def _pick_batch_tile(B):
    """Batch tile: feed the 256-wide MXU (v6e/v7x) and keep >= 2 grid blocks
    along the "parallel" axis once B >= 16 so v7x's 2 TensorCores both run."""
    if B < 16:
        return B
    for bt in (512, 384, 256, 128, 64, 32, 16, 8):
        if bt * 2 <= B and B % bt == 0:
            return bt
    return B


def neural_automaton_forward(x, P, start_state, accept_states, *,
                             batch_tile=None):
    """x: (B, T, S) float32; returns (B, C) float32."""
    B, T, S = x.shape
    N = P.shape[1]
    C = accept_states.shape[1]
    SN = S * N

    if T == 0:
        # No symbols consumed: class_probs = start_state @ accept_states.
        probs = jnp.dot(start_state.reshape(1, N),
                        accept_states).astype(jnp.float32)
        return jnp.broadcast_to(probs, (B, C))

    # P_flat[n, s*N + m] = P[s, n, m]
    P_flat = jnp.transpose(P, (1, 0, 2)).reshape(N, SN)
    # Constants for the expanded-space recurrence (all tiny, wrapper-side).
    y0 = jnp.dot(start_state.reshape(1, N), P_flat)            # (1, S*N)
    PR = jnp.tile(P_flat, (S, 1))                              # (S*N, S*N)
    E = jnp.repeat(jnp.eye(S, dtype=jnp.float32), N, axis=1)   # (S, S*N)
    accept_tiled = jnp.tile(accept_states, (S, 1))             # (S*N, C)

    if batch_tile is None:
        batch_tile = _pick_batch_tile(B)
    if B % batch_tile != 0:            # keep output-block constraints trivial
        batch_tile = B
    grid = (B // batch_tile,)

    # Advisory cost hint for XLA's scheduler around the custom call.
    flops = int(2 * B * (T * S * SN + max(T - 1, 0) * SN * SN + SN * C))
    bytes_accessed = int(4 * (B * T * S + SN + SN * SN + S * SN + SN * C
                              + B * C))

    return pl.pallas_call(
        automaton_kernel,
        out_shape=jax.ShapeDtypeStruct((B, C), jnp.float32),
        grid_spec=pltpu.PrefetchScalarGridSpec(
            num_scalar_prefetch=0,
            grid=grid,
            in_specs=[
                pl.BlockSpec((batch_tile, T, S), lambda i: (i, 0, 0)),
                pl.BlockSpec((1, SN), lambda i: (0, 0)),
                pl.BlockSpec((SN, SN), lambda i: (0, 0)),
                pl.BlockSpec((S, SN), lambda i: (0, 0)),
                pl.BlockSpec((SN, C), lambda i: (0, 0)),
            ],
            out_specs=pl.BlockSpec((batch_tile, C), lambda i: (i, 0)),
            scratch_shapes=[pltpu.VMEM((batch_tile, T, SN), jnp.float32)],
        ),
        compiler_params=pltpu.CompilerParams(
            dimension_semantics=("parallel",),
            vmem_limit_bytes=32 * 1024 * 1024,
        ),
        cost_estimate=pl.CostEstimate(
            flops=flops, transcendentals=0, bytes_accessed=bytes_accessed),
    )(x, y0, PR, E, accept_tiled)


def reference_forward(x, P, start_state, accept_states):
    B, T, S = x.shape
    N = P.shape[1]
    state = jnp.broadcast_to(start_state[None, :], (B, N))
    for t in range(T):
        wP = jnp.einsum('bs,snm->bnm', x[:, t, :], P)
        state = jnp.einsum('bn,bnm->bm', state, wP)
    return jnp.einsum('bn,nc->bc', state, accept_states)


if __name__ == "__main__":
    num_states = 10
    num_symbols = 10
    num_classes = 2
    batch = 2
    seq_len = 8

    key = jax.random.PRNGKey(0)
    k_p, k_s, k_a, k_x = jax.random.split(key, 4)

    # Deterministic parameter init mirroring the PyTorch __init__.
    P = jax.nn.softmax(
        jax.random.normal(k_p, (num_symbols, num_states, num_states),
                          dtype=jnp.float32), axis=2)
    start_state = jax.nn.softmax(
        jax.random.normal(k_s, (num_states,), dtype=jnp.float32), axis=0)
    accept_states = jax.nn.softmax(
        jax.random.normal(k_a, (num_states, num_classes), dtype=jnp.float32),
        axis=1)

    # Input sequence of per-symbol weights (soft symbols).
    x = jax.nn.softmax(
        jax.random.normal(k_x, (batch, seq_len, num_symbols),
                          dtype=jnp.float32), axis=-1)

    out = neural_automaton_forward(x, P, start_state, accept_states)
    out = jax.block_until_ready(out)

    ref = reference_forward(x, P, start_state, accept_states)
    assert out.shape == (batch, num_classes)
    assert jnp.allclose(out, ref, rtol=1e-5, atol=1e-6), (out, ref)

    print("KERNEL_OK")
</pallas_src>

<mosaic_0001>
module attributes {stable_mosaic.version = 11 : i64} {
  func.func @automaton_kernel(%arg0: i32, %arg1: memref<2x8x10xf32, #tpu.memory_space<vmem>>, %arg2: memref<1x100xf32, #tpu.memory_space<vmem>>, %arg3: memref<100x100xf32, #tpu.memory_space<vmem>>, %arg4: memref<10x100xf32, #tpu.memory_space<vmem>>, %arg5: memref<100x2xf32, #tpu.memory_space<vmem>>, %arg6: memref<2x2xf32, #tpu.memory_space<vmem>>, %arg7: memref<2x8x100xf32, #tpu.memory_space<vmem>>) attributes {dimension_semantics = [#tpu.dimension_semantics<parallel>], iteration_bounds = array<i64: 1>, scalar_prefetch = 0 : i64, scratch_operands = 1 : i64, tpu.core_type = #tpu.core_type<tc>, window_params = [{transform_indices = @transform_0, window_bounds = array<i64: 2, 8, 10>}, {pipeline_mode = #tpu.pipeline_mode<synchronous>, transform_indices = @transform_1, window_bounds = array<i64: 1, 100>}, {pipeline_mode = #tpu.pipeline_mode<synchronous>, transform_indices = @transform_2, window_bounds = array<i64: 100, 100>}, {pipeline_mode = #tpu.pipeline_mode<synchronous>, transform_indices = @transform_3, window_bounds = array<i64: 10, 100>}, {pipeline_mode = #tpu.pipeline_mode<synchronous>, transform_indices = @transform_4, window_bounds = array<i64: 100, 2>}, {transform_indices = @transform_5, window_bounds = array<i64: 2, 2>}]} {
    %c0 = arith.constant 0 : index
    %c0_0 = arith.constant 0 : index
    %0 = vector.load %arg4[%c0, %c0_0] : memref<10x100xf32, #tpu.memory_space<vmem>>, vector<10x100xf32>
    %c0_1 = arith.constant 0 : index
    %c0_2 = arith.constant 0 : index
    %c0_3 = arith.constant 0 : index
    %1 = vector.load %arg1[%c0_1, %c0_2, %c0_3] : memref<2x8x10xf32, #tpu.memory_space<vmem>>, vector<2x8x10xf32>
    %2 = vector.shape_cast %1 : vector<2x8x10xf32> to vector<16x10xf32>
    %cst = arith.constant dense<0.000000e+00> : vector<16x100xf32>
    %3 = tpu.matmul %2, %0, %cst {dimension_numbers = #tpu.dot_dimension_numbers<[1], [0], [0], [1], [0, 0, 1, 1], [], []>} : vector<16x10xf32>, vector<10x100xf32>, vector<16x100xf32> -> vector<16x100xf32>
    %4 = vector.shape_cast %3 : vector<16x100xf32> to vector<2x8x100xf32>
    %c0_4 = arith.constant 0 : index
    %c0_5 = arith.constant 0 : index
    %c0_6 = arith.constant 0 : index
    %5 = vector.load %arg7[%c0_4, %c0_5, %c0_6] : memref<2x8x100xf32, #tpu.memory_space<vmem>>, vector<2x8x100xf32>
    tpu.vector_store %arg7[%c0_4, %c0_5, %c0_6], %4 {strides = array<i32>} : memref<2x8x100xf32, #tpu.memory_space<vmem>>, vector<2x8x100xf32>,
    %c0_7 = arith.constant 0 : index
    %c0_8 = arith.constant 0 : index
    %6 = vector.load %arg3[%c0_7, %c0_8] : memref<100x100xf32, #tpu.memory_space<vmem>>, vector<100x100xf32>
    %c0_9 = arith.constant 0 : index
    %c0_10 = arith.constant 0 : index
    %7 = vector.load %arg2[%c0_9, %c0_10] : memref<1x100xf32, #tpu.memory_space<vmem>>, vector<1x100xf32>
    %8 = vector.shape_cast %7 : vector<1x100xf32> to vector<1x100xf32>
    %9 = vector.broadcast %8 : vector<1x100xf32> to vector<2x100xf32>
    %c0_11 = arith.constant 0 : index
    %c0_12 = arith.constant 0 : index
    %c0_13 = arith.constant 0 : index
    %10 = vector.load %arg7[%c0_11, %c0_12, %c0_13] : memref<2x8x100xf32, #tpu.memory_space<vmem>>, vector<2x1x100xf32>
    %11 = vector.shape_cast %10 : vector<2x1x100xf32> to vector<2x100xf32>
    %12 = arith.mulf %11, %9 : vector<2x100xf32>
    %cst_14 = arith.constant dense<0.000000e+00> : vector<2x100xf32>
    %13 = tpu.matmul %12, %6, %cst_14 {dimension_numbers = #tpu.dot_dimension_numbers<[1], [0], [0], [1], [0, 0, 1, 1], [], []>} : vector<2x100xf32>, vector<100x100xf32>, vector<2x100xf32> -> vector<2x100xf32>
    %c0_15 = arith.constant 0 : index
    %c1 = arith.constant 1 : index
    %c0_16 = arith.constant 0 : index
    %14 = vector.load %arg7[%c0_15, %c1, %c0_16] : memref<2x8x100xf32, #tpu.memory_space<vmem>>, vector<2x1x100xf32>
    %15 = vector.shape_cast %14 : vector<2x1x100xf32> to vector<2x100xf32>
    %16 = arith.mulf %15, %13 : vector<2x100xf32>
    %cst_17 = arith.constant dense<0.000000e+00> : vector<2x100xf32>
    %17 = tpu.matmul %16, %6, %cst_17 {dimension_numbers = #tpu.dot_dimension_numbers<[1], [0], [0], [1], [0, 0, 1, 1], [], []>} : vector<2x100xf32>, vector<100x100xf32>, vector<2x100xf32> -> vector<2x100xf32>
    %c0_18 = arith.constant 0 : index
    %c2 = arith.constant 2 : index
    %c0_19 = arith.constant 0 : index
    %18 = vector.load %arg7[%c0_18, %c2, %c0_19] : memref<2x8x100xf32, #tpu.memory_space<vmem>>, vector<2x1x100xf32>
    %19 = vector.shape_cast %18 : vector<2x1x100xf32> to vector<2x100xf32>
    %20 = arith.mulf %19, %17 : vector<2x100xf32>
    %cst_20 = arith.constant dense<0.000000e+00> : vector<2x100xf32>
    %21 = tpu.matmul %20, %6, %cst_20 {dimension_numbers = #tpu.dot_dimension_numbers<[1], [0], [0], [1], [0, 0, 1, 1], [], []>} : vector<2x100xf32>, vector<100x100xf32>, vector<2x100xf32> -> vector<2x100xf32>
    %c0_21 = arith.constant 0 : index
    %c3 = arith.constant 3 : index
    %c0_22 = arith.constant 0 : index
    %22 = vector.load %arg7[%c0_21, %c3, %c0_22] : memref<2x8x100xf32, #tpu.memory_space<vmem>>, vector<2x1x100xf32>
    %23 = vector.shape_cast %22 : vector<2x1x100xf32> to vector<2x100xf32>
    %24 = arith.mulf %23, %21 : vector<2x100xf32>
    %cst_23 = arith.constant dense<0.000000e+00> : vector<2x100xf32>
    %25 = tpu.matmul %24, %6, %cst_23 {dimension_numbers = #tpu.dot_dimension_numbers<[1], [0], [0], [1], [0, 0, 1, 1], [], []>} : vector<2x100xf32>, vector<100x100xf32>, vector<2x100xf32> -> vector<2x100xf32>
    %c0_24 = arith.constant 0 : index
    %c4 = arith.constant 4 : index
    %c0_25 = arith.constant 0 : index
    %26 = vector.load %arg7[%c0_24, %c4, %c0_25] : memref<2x8x100xf32, #tpu.memory_space<vmem>>, vector<2x1x100xf32>
    %27 = vector.shape_cast %26 : vector<2x1x100xf32> to vector<2x100xf32>
    %28 = arith.mulf %27, %25 : vector<2x100xf32>
    %cst_26 = arith.constant dense<0.000000e+00> : vector<2x100xf32>
    %29 = tpu.matmul %28, %6, %cst_26 {dimension_numbers = #tpu.dot_dimension_numbers<[1], [0], [0], [1], [0, 0, 1, 1], [], []>} : vector<2x100xf32>, vector<100x100xf32>, vector<2x100xf32> -> vector<2x100xf32>
    %c0_27 = arith.constant 0 : index
    %c5 = arith.constant 5 : index
    %c0_28 = arith.constant 0 : index
    %30 = vector.load %arg7[%c0_27, %c5, %c0_28] : memref<2x8x100xf32, #tpu.memory_space<vmem>>, vector<2x1x100xf32>
    %31 = vector.shape_cast %30 : vector<2x1x100xf32> to vector<2x100xf32>
    %32 = arith.mulf %31, %29 : vector<2x100xf32>
    %cst_29 = arith.constant dense<0.000000e+00> : vector<2x100xf32>
    %33 = tpu.matmul %32, %6, %cst_29 {dimension_numbers = #tpu.dot_dimension_numbers<[1], [0], [0], [1], [0, 0, 1, 1], [], []>} : vector<2x100xf32>, vector<100x100xf32>, vector<2x100xf32> -> vector<2x100xf32>
    %c0_30 = arith.constant 0 : index
    %c6 = arith.constant 6 : index
    %c0_31 = arith.constant 0 : index
    %34 = vector.load %arg7[%c0_30, %c6, %c0_31] : memref<2x8x100xf32, #tpu.memory_space<vmem>>, vector<2x1x100xf32>
    %35 = vector.shape_cast %34 : vector<2x1x100xf32> to vector<2x100xf32>
    %36 = arith.mulf %35, %33 : vector<2x100xf32>
    %cst_32 = arith.constant dense<0.000000e+00> : vector<2x100xf32>
    %37 = tpu.matmul %36, %6, %cst_32 {dimension_numbers = #tpu.dot_dimension_numbers<[1], [0], [0], [1], [0, 0, 1, 1], [], []>} : vector<2x100xf32>, vector<100x100xf32>, vector<2x100xf32> -> vector<2x100xf32>
    %c0_33 = arith.constant 0 : index
    %c7 = arith.constant 7 : index
    %c0_34 = arith.constant 0 : index
    %38 = vector.load %arg7[%c0_33, %c7, %c0_34] : memref<2x8x100xf32, #tpu.memory_space<vmem>>, vector<2x1x100xf32>
    %39 = vector.shape_cast %38 : vector<2x1x100xf32> to vector<2x100xf32>
    %40 = arith.mulf %39, %37 : vector<2x100xf32>
    %c0_35 = arith.constant 0 : index
    %c0_36 = arith.constant 0 : index
    %41 = vector.load %arg5[%c0_35, %c0_36] : memref<100x2xf32, #tpu.memory_space<vmem>>, vector<100x2xf32>
    %cst_37 = arith.constant dense<0.000000e+00> : vector<2x2xf32>
    %42 = tpu.matmul %40, %41, %cst_37 {dimension_numbers = #tpu.dot_dimension_numbers<[1], [0], [0], [1], [0, 0, 1, 1], [], []>} : vector<2x100xf32>, vector<100x2xf32>, vector<2x2xf32> -> vector<2x2xf32>
    %c0_38 = arith.constant 0 : index
    %c0_39 = arith.constant 0 : index
    %43 = vector.load %arg6[%c0_38, %c0_39] : memref<2x2xf32, #tpu.memory_space<vmem>>, vector<2x2xf32>
    tpu.vector_store %arg6[%c0_38, %c0_39], %42 {strides = array<i32>} : memref<2x2xf32, #tpu.memory_space<vmem>>, vector<2x2xf32>,
    return
  }
  func.func @transform_0(%arg0: i32) -> (i32, i32, i32) {
    %c0_i32 = arith.constant 0 : i32
    %c0_i32_0 = arith.constant 0 : i32
    %c0_i32_1 = arith.constant 0 : i32
    return %arg0, %c0_i32, %c0_i32_0 : i32, i32, i32
  }
  func.func @transform_1(%arg0: i32) -> (i32, i32) {
    %c0_i32 = arith.constant 0 : i32
    %c0_i32_0 = arith.constant 0 : i32
    %c0_i32_1 = arith.constant 0 : i32
    return %c0_i32, %c0_i32_0 : i32, i32
  }
  func.func @transform_2(%arg0: i32) -> (i32, i32) {
    %c0_i32 = arith.constant 0 : i32
    %c0_i32_0 = arith.constant 0 : i32
    %c0_i32_1 = arith.constant 0 : i32
    return %c0_i32, %c0_i32_0 : i32, i32
  }
  func.func @transform_3(%arg0: i32) -> (i32, i32) {
    %c0_i32 = arith.constant 0 : i32
    %c0_i32_0 = arith.constant 0 : i32
    %c0_i32_1 = arith.constant 0 : i32
    return %c0_i32, %c0_i32_0 : i32, i32
  }
  func.func @transform_4(%arg0: i32) -> (i32, i32) {
    %c0_i32 = arith.constant 0 : i32
    %c0_i32_0 = arith.constant 0 : i32
    %c0_i32_1 = arith.constant 0 : i32
    return %c0_i32, %c0_i32_0 : i32, i32
  }
  func.func @transform_5(%arg0: i32) -> (i32, i32) {
    %c0_i32 = arith.constant 0 : i32
    %c0_i32_0 = arith.constant 0 : i32
    return %arg0, %c0_i32 : i32, i32
  }
}

</mosaic_0001>

<llo_original>
// kernel: tpu_custom_call.1
$region0: #{tpu_custom_call.1}
  #allocation0 [shape = 'u32[]', space=smem, size = 0x4, offset = 0x4, fixed_abs, tag = 'smem constant byte address 0x4 - core index']
  #allocation1 [shape = 'u32[144,128]{1,0:T(1,128)}', space=vmem, size = 0x12000, scoped, tag = 'internal scratch']
  #allocation2 [shape = 'f32[2,8,100]{2,1,0:T(8,128)}', space=vmem, size = 0x2000, scoped, tag = 'scratch operand']
  %s0 = inlined_call_operand.hbm [shape: f32[2,8,10], index: 0, kind: input, shape index: {}]
  %s1 = inlined_call_operand.vmem [shape: f32[1,100], index: 1, kind: input, shape index: {}]
  %s2 = inlined_call_operand.vmem [shape: f32[100,100], index: 2, kind: input, shape index: {}]
  %s3 = inlined_call_operand.hbm [shape: f32[10,100], index: 3, kind: input, shape index: {}]
  %s4 = inlined_call_operand.vmem [shape: f32[100,2], index: 4, kind: input, shape index: {}]
  %s5 = inlined_call_operand.hbm [shape: f32[2,2], index: 5, kind: output, shape index: {}]
  %s6 = sld [smem:[#allocation0]]
  $region38: #{tpu_custom_call.1} parent=0
    _
  %s8 = ssub.s32 1, %s6
  %s9 = scalar_select 0, %s8, %s6
  $region1: #{tpu_custom_call.1} parent=0
    #allocation3 [shape = 'u8[8192]{0}', space=vmem, size = 0x2000, scoped, tag = 'input window, operand 0, single buffered']
    #allocation4 [shape = 's32[1]{0}', space=sflag, size = 0x4, scoped, tag = 'scoped memory for tpu_custom_call.1']
    #allocation5 [shape = 's32[1]{0}', space=sflag, size = 0x4, scoped, tag = 'scoped memory for tpu_custom_call.1']
    #allocation6 [shape = 'u8[8192]{0}', space=vmem, size = 0x2000, scoped, tag = 'input window, operand 3, single buffered']
    #allocation7 [shape = 's32[1]{0}', space=sflag, size = 0x4, scoped, tag = 'scoped memory for tpu_custom_call.1']
    #allocation8 [shape = 'u8[1024]{0}', space=vmem, size = 0x400, scoped, tag = 'output window, operand 0, single buffered']
    %10 = vsyncpa [#allocation4], 0
    %11 = vsyncpa [#allocation7], 0
    %12 = vsyncpa [#allocation5], 0
    // Predicated region
    $region2: #{tpu_custom_call.1} parent=1 // pred_check
      _
    $region3: #{tpu_custom_call.1} parent=1 // pred_check_branch
      %14 = sbr.rel (0) target = $region5
    $region4: #{tpu_custom_call.1} parent=1 // pred_region
      %s16 = ssub.s32 256, 256
      %17 = vsyncadd [#allocation4], %s16
      %s18 = sshll.u32 [#allocation3], 4
      %s19 = int_to_ptr.vmem [resolvable:$true] %s18
      %24 = dma.hbm_to_vmem [thread:$0]  %s0, 256, %s19, [#allocation4], 128, 128, 8
    $region5: #{tpu_custom_call.1} parent=1 // pred_fallthru
      _
    // Predicated region
    $region6: #{tpu_custom_call.1} parent=1 // pred_check
      _
    $region7: #{tpu_custom_call.1} parent=1 // pred_check_branch
      %26 = sbr.rel (0) target = $region9
    $region8: #{tpu_custom_call.1} parent=1 // pred_region
      _
    $region9: #{tpu_custom_call.1} parent=1 // pred_fallthru
      _
    // Predicated region
    $region10: #{tpu_custom_call.1} parent=1 // pred_check
      _
    $region11: #{tpu_custom_call.1} parent=1 // pred_check_branch
      %28 = sbr.rel (0) target = $region13
    $region12: #{tpu_custom_call.1} parent=1 // pred_region
      _
    $region13: #{tpu_custom_call.1} parent=1 // pred_fallthru
      _
    // Predicated region
    $region14: #{tpu_custom_call.1} parent=1 // pred_check
      _
    $region15: #{tpu_custom_call.1} parent=1 // pred_check_branch
      %30 = sbr.rel (0) target = $region17
    $region16: #{tpu_custom_call.1} parent=1 // pred_region
      %s32 = ssub.s32 256, 256
      %33 = vsyncadd [#allocation7], %s32
      %s34 = sshll.u32 [#allocation6], 4
      %s35 = int_to_ptr.vmem [resolvable:$true] %s34
      %40 = dma.hbm_to_vmem [thread:$0]  %s3, 256, %s35, [#allocation7], 128, 128, 8
    $region17: #{tpu_custom_call.1} parent=1 // pred_fallthru
      _
    // Predicated region
    $region18: #{tpu_custom_call.1} parent=1 // pred_check
      _
    $region19: #{tpu_custom_call.1} parent=1 // pred_check_branch
      %42 = sbr.rel (0) target = $region21
    $region20: #{tpu_custom_call.1} parent=1 // pred_region
      _
    $region21: #{tpu_custom_call.1} parent=1 // pred_fallthru
      _
    // Predicated region
    $region22: #{tpu_custom_call.1} parent=1 // pred_check
      _
    $region23: #{tpu_custom_call.1} parent=1 // pred_check_branch
      %44 = sbr.rel (0) target = $region25
    $region24: #{tpu_custom_call.1} parent=1 // pred_region
      %45 = dma.done [#allocation4], 256
    $region25: #{tpu_custom_call.1} parent=1 // pred_fallthru
      _
    // Predicated region
    $region26: #{tpu_custom_call.1} parent=1 // pred_check
      _
    $region27: #{tpu_custom_call.1} parent=1 // pred_check_branch
      %47 = sbr.rel (0) target = $region29
    $region28: #{tpu_custom_call.1} parent=1 // pred_region
      %48 = dma.done [#allocation7], 256
    $region29: #{tpu_custom_call.1} parent=1 // pred_fallthru
      _
    %v49 = vld [vmem:[#allocation6] sm:$0xff]
    %v50 = vld [vmem:[#allocation6 + $0x8] sm:$0x3]
    %v51 = vld [vmem:[#allocation3] sm:$0xff]
    %v52 = vld [vmem:[#allocation3 + $0x8] sm:$0xff]
    %vm53 = vcmask 80896
    %v55 = vsel %vm53, %v51, 0
    %v58 = vsel %vm53, %v52, 0
    %vm60 = vcmask 1041408
    %v62 = vsel %vm60, %v50, 0
    %64 = vmatprep.subr.mxu0 0.0
    %65 = vmatpush1.msra.mxu0 0.0
    %66 = vmatprep.subr.mxu0 0.0
    %67 = vmatpush1.msra.mxu0 0.0
    %68 = vmatprep.subr.mxu0 0.0
    %69 = vmatpush1.msra.mxu0 0.0
    %70 = vmatprep.subr.mxu0 0.0
    %71 = vmatpush1.msra.mxu0 0.0
    %72 = vmatprep.subr.mxu0 0.0
    %73 = vmatpush1.msra.mxu0 0.0
    %74 = vmatprep.subr.mxu0 0.0
    %75 = vmatpush1.msra.mxu0 0.0
    %76 = vmatprep.subr.mxu0 0.0
    %77 = vmatpush1.msra.mxu0 0.0
    %78 = vmatprep.subr.mxu0 0.0
    %79 = vmatpush1.msra.mxu0 0.0
    %80 = vmatprep.subr.mxu0 0.0
    %81 = vmatpush1.msra.mxu0 0.0
    %82 = vmatprep.subr.mxu0 0.0
    %83 = vmatpush1.msra.mxu0 0.0
    %84 = vmatprep.subr.mxu0 0.0
    %85 = vmatpush1.msra.mxu0 0.0
    %86 = vmatprep.subr.mxu0 0.0
    %87 = vmatpush1.msra.mxu0 0.0
    %88 = vmatprep.subr.mxu0 0.0
    %89 = vmatpush1.msra.mxu0 0.0
    %90 = vmatprep.subr.mxu0 0.0
    %91 = vmatpush1.msra.mxu0 0.0
    %92 = vmatprep.subr.mxu0 0.0
    %93 = vmatpush1.msra.mxu0 %v62
    %94 = vmatprep.subr.mxu0 0.0
    %95 = vmatpush1.msra.mxu0 %v49
    %96 = vmatprep.subr.mxu0 0.0
    %97 = vmatpush2.msra.mxu0 0.0
    %98 = vmatprep.subr.mxu0 0.0
    %99 = vmatpush2.msra.mxu0 0.0
    %100 = vmatprep.subr.mxu0 0.0
    %101 = vmatpush2.msra.mxu0 0.0
    %102 = vmatprep.subr.mxu0 0.0
    %103 = vmatpush2.msra.mxu0 0.0
    %104 = vmatprep.subr.mxu0 0.0
    %105 = vmatpush2.msra.mxu0 0.0
    %106 = vmatprep.subr.mxu0 0.0
    %107 = vmatpush2.msra.mxu0 0.0
    %108 = vmatprep.subr.mxu0 0.0
    %109 = vmatpush2.msra.mxu0 0.0
    %110 = vmatprep.subr.mxu0 0.0
    %111 = vmatpush2.msra.mxu0 0.0
    %112 = vmatprep.subr.mxu0 0.0
    %113 = vmatpush2.msra.mxu0 0.0
    %114 = vmatprep.subr.mxu0 0.0
    %115 = vmatpush2.msra.mxu0 0.0
    %116 = vmatprep.subr.mxu0 0.0
    %117 = vmatpush2.msra.mxu0 0.0
    %118 = vmatprep.subr.mxu0 0.0
    %119 = vmatpush2.msra.mxu0 0.0
    %120 = vmatprep.subr.mxu0 0.0
    %121 = vmatpush2.msra.mxu0 0.0
    %122 = vmatprep.subr.mxu0 0.0
    %123 = vmatpush2.msra.mxu0 0.0
    %124 = vmatprep.subr.mxu0 0.0
    %125 = vmatpush2.msra.mxu0 0.0
    %126 = vmatprep.subr.mxu0 0.0
    %127 = vmatpush2.msra.mxu0 0.0
    %128 = vmatprep.mubr.f32.mxu0 0.0
    %129 = vmatmul.mubr.f32.gmra.mxu0 %v55
    %v130 = vpop.f32.mrf.mxu0
    %v131 = vadd.f32 0.0, %v130
    %v132 = vpop.f32.mrf.mxu0
    %133 = vmatprep.mubr.f32.mxu0 0.0
    %134 = vmatmul.mubr.f32.gmra.mxu0 %v58
    %v135 = vpop.f32.mrf.mxu0
    %v136 = vadd.f32 0.0, %v135
    %v137 = vpop.f32.mrf.mxu0
    %138 = vdwg.mxu0
    %vm139 = vcmask 818176
    %140 = vst.msk [vmem:[#allocation2] sm:$0xff] %vm139, %v131
    %141 = vst.msk [vmem:[#allocation2 + $0x8] sm:$0xff] %vm139, %v136
    %v142 = vld [vmem:[%s2] sm:$0xff]
    %v143 = vld [vmem:[%s2 + $0x8] sm:$0xff]
    %v144 = vld [vmem:[%s2 + $0x10] sm:$0xff]
    %v145 = vld [vmem:[%s2 + $0x18] sm:$0xff]
    %v146 = vld [vmem:[%s2 + $0x20] sm:$0xff]
    %v147 = vld [vmem:[%s2 + $0x28] sm:$0xff]
    %v148 = vld [vmem:[%s2 + $0x30] sm:$0xff]
    %v149 = vld [vmem:[%s2 + $0x38] sm:$0xff]
    %v150 = vld [vmem:[%s2 + $0x40] sm:$0xff]
    %v151 = vld [vmem:[%s2 + $0x48] sm:$0xff]
    %v152 = vld [vmem:[%s2 + $0x50] sm:$0xff]
    %v153 = vld [vmem:[%s2 + $0x58] sm:$0xff]
    %v154 = vld [vmem:[%s2 + $0x60] sm:$0xf]
    %v155 = vld [vmem:[%s1] sm:$0x1]
    %v157 = vlaneseq
    %v158 = vshrl.u32 %v157, 7
    %v159 = vsub.s32 0, %v158
    %v160 = vrot.slane %v155, %v159
    %v162 = vld [vmem:[#allocation2] sm:$0x1]
    %v163 = vld [vmem:[#allocation2 + $0x8] sm:$0x1]
    %v164 = vmul.f32 %v162, %v160
    %v165 = vmul.f32 %v163, %v160
    %v168 = vrot.slane %v165, 7
    %vm169 = vcmask 1041409
    %v170 = vsel %vm169, %v168, %v164
    %v171 = vsel %vm139, %v170, 0
    %vm173 = vcmask 1043456
    %v175 = vsel %vm173, %v154, 0
    %177 = vmatprep.subr.mxu0 0.0
    %178 = vmatpush1.msra.mxu0 0.0
    %179 = vmatprep.subr.mxu0 0.0
    %180 = vmatpush1.msra.mxu0 0.0
    %181 = vmatprep.subr.mxu0 0.0
    %182 = vmatpush1.msra.mxu0 0.0
    %183 = vmatprep.subr.mxu0 0.0
    %184 = vmatpush1.msra.mxu0 %v175
    %185 = vmatprep.subr.mxu0 0.0
    %186 = vmatpush1.msra.mxu0 %v153
    %187 = vmatprep.subr.mxu0 0.0
    %188 = vmatpush1.msra.mxu0 %v152
    %189 = vmatprep.subr.mxu0 0.0
    %190 = vmatpush1.msra.mxu0 %v151
    %191 = vmatprep.subr.mxu0 0.0
    %192 = vmatpush1.msra.mxu0 %v150
    %193 = vmatprep.subr.mxu0 0.0
    %194 = vmatpush1.msra.mxu0 %v149
    %195 = vmatprep.subr.mxu0 0.0
    %196 = vmatpush1.msra.mxu0 %v148
    %197 = vmatprep.subr.mxu0 0.0
    %198 = vmatpush1.msra.mxu0 %v147
    %199 = vmatprep.subr.mxu0 0.0
    %200 = vmatpush1.msra.mxu0 %v146
    %201 = vmatprep.subr.mxu0 0.0
    %202 = vmatpush1.msra.mxu0 %v145
    %203 = vmatprep.subr.mxu0 0.0
    %204 = vmatpush1.msra.mxu0 %v144
    %205 = vmatprep.subr.mxu0 0.0
    %206 = vmatpush1.msra.mxu0 %v143
    %207 = vmatprep.subr.mxu0 0.0
    %208 = vmatpush1.msra.mxu0 %v142
    %209 = vmatprep.subr.mxu0 0.0
    %210 = vmatpush2.msra.mxu0 0.0
    %211 = vmatprep.subr.mxu0 0.0
    %212 = vmatpush2.msra.mxu0 0.0
    %213 = vmatprep.subr.mxu0 0.0
    %214 = vmatpush2.msra.mxu0 0.0
    %215 = vmatprep.subr.mxu0 0.0
    %216 = vmatpush2.msra.mxu0 0.0
    %217 = vmatprep.subr.mxu0 0.0
    %218 = vmatpush2.msra.mxu0 0.0
    %219 = vmatprep.subr.mxu0 0.0
    %220 = vmatpush2.msra.mxu0 0.0
    %221 = vmatprep.subr.mxu0 0.0
    %222 = vmatpush2.msra.mxu0 0.0
    %223 = vmatprep.subr.mxu0 0.0
    %224 = vmatpush2.msra.mxu0 0.0
    %225 = vmatprep.subr.mxu0 0.0
    %226 = vmatpush2.msra.mxu0 0.0
    %227 = vmatprep.subr.mxu0 0.0
    %228 = vmatpush2.msra.mxu0 0.0
    %229 = vmatprep.subr.mxu0 0.0
    %230 = vmatpush2.msra.mxu0 0.0
    %231 = vmatprep.subr.mxu0 0.0
    %232 = vmatpush2.msra.mxu0 0.0
    %233 = vmatprep.subr.mxu0 0.0
    %234 = vmatpush2.msra.mxu0 0.0
    %235 = vmatprep.subr.mxu0 0.0
    %236 = vmatpush2.msra.mxu0 0.0
    %237 = vmatprep.subr.mxu0 0.0
    %238 = vmatpush2.msra.mxu0 0.0
    %239 = vmatprep.subr.mxu0 0.0
    %240 = vmatpush2.msra.mxu0 0.0
    %241 = vmatprep.mubr.f32.mxu0 0.0
    %242 = vmatmul.mubr.f32.gmra.mxu0 %v171
    %v243 = vpop.f32.mrf.mxu0
    %v244 = vadd.f32 0.0, %v243
    %v245 = vpop.f32.mrf.mxu0
    %246 = vdwg.mxu0
    %v247 = vld [vmem:[#allocation2 + $0x1] sm:$0x1]
    %v248 = vld [vmem:[#allocation2 + $0x9] sm:$0x1]
    %v250 = vrot.slane %v244, 1
    %v253 = vmul.f32 %v247, %v244
    %v254 = vmul.f32 %v248, %v250
    %v257 = vrot.slane %v254, 7
    %v258 = vsel %vm169, %v257, %v253
    %v259 = vsel %vm139, %v258, 0
    %261 = vmatprep.subr.mxu0 0.0
    %262 = vmatpush1.msra.mxu0 0.0
    %263 = vmatprep.subr.mxu0 0.0
    %264 = vmatpush1.msra.mxu0 0.0
    %265 = vmatprep.subr.mxu0 0.0
    %266 = vmatpush1.msra.mxu0 0.0
    %267 = vmatprep.subr.mxu0 0.0
    %268 = vmatpush1.msra.mxu0 %v175
    %269 = vmatprep.subr.mxu0 0.0
    %270 = vmatpush1.msra.mxu0 %v153
    %271 = vmatprep.subr.mxu0 0.0
    %272 = vmatpush1.msra.mxu0 %v152
    %273 = vmatprep.subr.mxu0 0.0
    %274 = vmatpush1.msra.mxu0 %v151
    %275 = vmatprep.subr.mxu0 0.0
    %276 = vmatpush1.msra.mxu0 %v150
    %277 = vmatprep.subr.mxu0 0.0
    %278 = vmatpush1.msra.mxu0 %v149
    %279 = vmatprep.subr.mxu0 0.0
    %280 = vmatpush1.msra.mxu0 %v148
    %281 = vmatprep.subr.mxu0 0.0
    %282 = vmatpush1.msra.mxu0 %v147
    %283 = vmatprep.subr.mxu0 0.0
    %284 = vmatpush1.msra.mxu0 %v146
    %285 = vmatprep.subr.mxu0 0.0
    %286 = vmatpush1.msra.mxu0 %v145
    %287 = vmatprep.subr.mxu0 0.0
    %288 = vmatpush1.msra.mxu0 %v144
    %289 = vmatprep.subr.mxu0 0.0
    %290 = vmatpush1.msra.mxu0 %v143
    %291 = vmatprep.subr.mxu0 0.0
    %292 = vmatpush1.msra.mxu0 %v142
    %293 = vmatprep.subr.mxu0 0.0
    %294 = vmatpush2.msra.mxu0 0.0
    %295 = vmatprep.subr.mxu0 0.0
    %296 = vmatpush2.msra.mxu0 0.0
    %297 = vmatprep.subr.mxu0 0.0
    %298 = vmatpush2.msra.mxu0 0.0
    %299 = vmatprep.subr.mxu0 0.0
    %300 = vmatpush2.msra.mxu0 0.0
    %301 = vmatprep.subr.mxu0 0.0
    %302 = vmatpush2.msra.mxu0 0.0
    %303 = vmatprep.subr.mxu0 0.0
    %304 = vmatpush2.msra.mxu0 0.0
    %305 = vmatprep.subr.mxu0 0.0
    %306 = vmatpush2.msra.mxu0 0.0
    %307 = vmatprep.subr.mxu0 0.0
    %308 = vmatpush2.msra.mxu0 0.0
    %309 = vmatprep.subr.mxu0 0.0
    %310 = vmatpush2.msra.mxu0 0.0
    %311 = vmatprep.subr.mxu0 0.0
    %312 = vmatpush2.msra.mxu0 0.0
    %313 = vmatprep.subr.mxu0 0.0
    %314 = vmatpush2.msra.mxu0 0.0
    %315 = vmatprep.subr.mxu0 0.0
    %316 = vmatpush2.msra.mxu0 0.0
    %317 = vmatprep.subr.mxu0 0.0
    %318 = vmatpush2.msra.mxu0 0.0
    %319 = vmatprep.subr.mxu0 0.0
    %320 = vmatpush2.msra.mxu0 0.0
    %321 = vmatprep.subr.mxu0 0.0
    %322 = vmatpush2.msra.mxu0 0.0
    %323 = vmatprep.subr.mxu0 0.0
    %324 = vmatpush2.msra.mxu0 0.0
    %325 = vmatprep.mubr.f32.mxu0 0.0
    %326 = vmatmul.mubr.f32.gmra.mxu0 %v259
    %v327 = vpop.f32.mrf.mxu0
    %v328 = vadd.f32 0.0, %v327
    %v329 = vpop.f32.mrf.mxu0
    %330 = vdwg.mxu0
    %v331 = vld [vmem:[#allocation2 + $0x2] sm:$0x1]
    %v332 = vld [vmem:[#allocation2 + $0xa] sm:$0x1]
    %v334 = vrot.slane %v328, 1
    %v337 = vmul.f32 %v331, %v328
    %v338 = vmul.f32 %v332, %v334
    %v341 = vrot.slane %v338, 7
    %v342 = vsel %vm169, %v341, %v337
    %v343 = vsel %vm139, %v342, 0
    %345 = vmatprep.subr.mxu0 0.0
    %346 = vmatpush1.msra.mxu0 0.0
    %347 = vmatprep.subr.mxu0 0.0
    %348 = vmatpush1.msra.mxu0 0.0
    %349 = vmatprep.subr.mxu0 0.0
    %350 = vmatpush1.msra.mxu0 0.0
    %351 = vmatprep.subr.mxu0 0.0
    %352 = vmatpush1.msra.mxu0 %v175
    %353 = vmatprep.subr.mxu0 0.0
    %354 = vmatpush1.msra.mxu0 %v153
    %355 = vmatprep.subr.mxu0 0.0
    %356 = vmatpush1.msra.mxu0 %v152
    %357 = vmatprep.subr.mxu0 0.0
    %358 = vmatpush1.msra.mxu0 %v151
    %359 = vmatprep.subr.mxu0 0.0
    %360 = vmatpush1.msra.mxu0 %v150
    %361 = vmatprep.subr.mxu0 0.0
    %362 = vmatpush1.msra.mxu0 %v149
    %363 = vmatprep.subr.mxu0 0.0
    %364 = vmatpush1.msra.mxu0 %v148
    %365 = vmatprep.subr.mxu0 0.0
    %366 = vmatpush1.msra.mxu0 %v147
    %367 = vmatprep.subr.mxu0 0.0
    %368 = vmatpush1.msra.mxu0 %v146
    %369 = vmatprep.subr.mxu0 0.0
    %370 = vmatpush1.msra.mxu0 %v145
    %371 = vmatprep.subr.mxu0 0.0
    %372 = vmatpush1.msra.mxu0 %v144
    %373 = vmatprep.subr.mxu0 0.0
    %374 = vmatpush1.msra.mxu0 %v143
    %375 = vmatprep.subr.mxu0 0.0
    %376 = vmatpush1.msra.mxu0 %v142
    %377 = vmatprep.subr.mxu0 0.0
    %378 = vmatpush2.msra.mxu0 0.0
    %379 = vmatprep.subr.mxu0 0.0
    %380 = vmatpush2.msra.mxu0 0.0
    %381 = vmatprep.subr.mxu0 0.0
    %382 = vmatpush2.msra.mxu0 0.0
    %383 = vmatprep.subr.mxu0 0.0
    %384 = vmatpush2.msra.mxu0 0.0
    %385 = vmatprep.subr.mxu0 0.0
    %386 = vmatpush2.msra.mxu0 0.0
    %387 = vmatprep.subr.mxu0 0.0
    %388 = vmatpush2.msra.mxu0 0.0
    %389 = vmatprep.subr.mxu0 0.0
    %390 = vmatpush2.msra.mxu0 0.0
    %391 = vmatprep.subr.mxu0 0.0
    %392 = vmatpush2.msra.mxu0 0.0
    %393 = vmatprep.subr.mxu0 0.0
    %394 = vmatpush2.msra.mxu0 0.0
    %395 = vmatprep.subr.mxu0 0.0
    %396 = vmatpush2.msra.mxu0 0.0
    %397 = vmatprep.subr.mxu0 0.0
    %398 = vmatpush2.msra.mxu0 0.0
    %399 = vmatprep.subr.mxu0 0.0
    %400 = vmatpush2.msra.mxu0 0.0
    %401 = vmatprep.subr.mxu0 0.0
    %402 = vmatpush2.msra.mxu0 0.0
    %403 = vmatprep.subr.mxu0 0.0
    %404 = vmatpush2.msra.mxu0 0.0
    %405 = vmatprep.subr.mxu0 0.0
    %406 = vmatpush2.msra.mxu0 0.0
    %407 = vmatprep.subr.mxu0 0.0
    %408 = vmatpush2.msra.mxu0 0.0
    %409 = vmatprep.mubr.f32.mxu0 0.0
    %410 = vmatmul.mubr.f32.gmra.mxu0 %v343
    %v411 = vpop.f32.mrf.mxu0
    %v412 = vadd.f32 0.0, %v411
    %v413 = vpop.f32.mrf.mxu0
    %414 = vdwg.mxu0
    %v415 = vld [vmem:[#allocation2 + $0x3] sm:$0x1]
    %v416 = vld [vmem:[#allocation2 + $0xb] sm:$0x1]
    %v418 = vrot.slane %v412, 1
    %v421 = vmul.f32 %v415, %v412
    %v422 = vmul.f32 %v416, %v418
    %v425 = vrot.slane %v422, 7
    %v426 = vsel %vm169, %v425, %v421
    %v427 = vsel %vm139, %v426, 0
    %429 = vmatprep.subr.mxu0 0.0
    %430 = vmatpush1.msra.mxu0 0.0
    %431 = vmatprep.subr.mxu0 0.0
    %432 = vmatpush1.msra.mxu0 0.0
    %433 = vmatprep.subr.mxu0 0.0
    %434 = vmatpush1.msra.mxu0 0.0
    %435 = vmatprep.subr.mxu0 0.0
    %436 = vmatpush1.msra.mxu0 %v175
    %437 = vmatprep.subr.mxu0 0.0
    %438 = vmatpush1.msra.mxu0 %v153
    %439 = vmatprep.subr.mxu0 0.0
    %440 = vmatpush1.msra.mxu0 %v152
    %441 = vmatprep.subr.mxu0 0.0
    %442 = vmatpush1.msra.mxu0 %v151
    %443 = vmatprep.subr.mxu0 0.0
    %444 = vmatpush1.msra.mxu0 %v150
    %445 = vmatprep.subr.mxu0 0.0
    %446 = vmatpush1.msra.mxu0 %v149
    %447 = vmatprep.subr.mxu0 0.0
    %448 = vmatpush1.msra.mxu0 %v148
    %449 = vmatprep.subr.mxu0 0.0
    %450 = vmatpush1.msra.mxu0 %v147
    %451 = vmatprep.subr.mxu0 0.0
    %452 = vmatpush1.msra.mxu0 %v146
    %453 = vmatprep.subr.mxu0 0.0
    %454 = vmatpush1.msra.mxu0 %v145
    %455 = vmatprep.subr.mxu0 0.0
    %456 = vmatpush1.msra.mxu0 %v144
    %457 = vmatprep.subr.mxu0 0.0
    %458 = vmatpush1.msra.mxu0 %v143
    %459 = vmatprep.subr.mxu0 0.0
    %460 = vmatpush1.msra.mxu0 %v142
    %461 = vmatprep.subr.mxu0 0.0
    %462 = vmatpush2.msra.mxu0 0.0
    %463 = vmatprep.subr.mxu0 0.0
    %464 = vmatpush2.msra.mxu0 0.0
    %465 = vmatprep.subr.mxu0 0.0
    %466 = vmatpush2.msra.mxu0 0.0
    %467 = vmatprep.subr.mxu0 0.0
    %468 = vmatpush2.msra.mxu0 0.0
    %469 = vmatprep.subr.mxu0 0.0
    %470 = vmatpush2.msra.mxu0 0.0
    %471 = vmatprep.subr.mxu0 0.0
    %472 = vmatpush2.msra.mxu0 0.0
    %473 = vmatprep.subr.mxu0 0.0
    %474 = vmatpush2.msra.mxu0 0.0
    %475 = vmatprep.subr.mxu0 0.0
    %476 = vmatpush2.msra.mxu0 0.0
    %477 = vmatprep.subr.mxu0 0.0
    %478 = vmatpush2.msra.mxu0 0.0
    %479 = vmatprep.subr.mxu0 0.0
    %480 = vmatpush2.msra.mxu0 0.0
    %481 = vmatprep.subr.mxu0 0.0
    %482 = vmatpush2.msra.mxu0 0.0
    %483 = vmatprep.subr.mxu0 0.0
    %484 = vmatpush2.msra.mxu0 0.0
    %485 = vmatprep.subr.mxu0 0.0
    %486 = vmatpush2.msra.mxu0 0.0
    %487 = vmatprep.subr.mxu0 0.0
    %488 = vmatpush2.msra.mxu0 0.0
    %489 = vmatprep.subr.mxu0 0.0
    %490 = vmatpush2.msra.mxu0 0.0
    %491 = vmatprep.subr.mxu0 0.0
    %492 = vmatpush2.msra.mxu0 0.0
    %493 = vmatprep.mubr.f32.mxu0 0.0
    %494 = vmatmul.mubr.f32.gmra.mxu0 %v427
    %v495 = vpop.f32.mrf.mxu0
    %v496 = vadd.f32 0.0, %v495
    %v497 = vpop.f32.mrf.mxu0
    %498 = vdwg.mxu0
    %v499 = vld [vmem:[#allocation2 + $0x4] sm:$0x1]
    %v500 = vld [vmem:[#allocation2 + $0xc] sm:$0x1]
    %v502 = vrot.slane %v496, 1
    %v505 = vmul.f32 %v499, %v496
    %v506 = vmul.f32 %v500, %v502
    %v509 = vrot.slane %v506, 7
    %v510 = vsel %vm169, %v509, %v505
    %v511 = vsel %vm139, %v510, 0
    %513 = vmatprep.subr.mxu0 0.0
    %514 = vmatpush1.msra.mxu0 0.0
    %515 = vmatprep.subr.mxu0 0.0
    %516 = vmatpush1.msra.mxu0 0.0
    %517 = vmatprep.subr.mxu0 0.0
    %518 = vmatpush1.msra.mxu0 0.0
    %519 = vmatprep.subr.mxu0 0.0
    %520 = vmatpush1.msra.mxu0 %v175
    %521 = vmatprep.subr.mxu0 0.0
    %522 = vmatpush1.msra.mxu0 %v153
    %523 = vmatprep.subr.mxu0 0.0
    %524 = vmatpush1.msra.mxu0 %v152
    %525 = vmatprep.subr.mxu0 0.0
    %526 = vmatpush1.msra.mxu0 %v151
    %527 = vmatprep.subr.mxu0 0.0
    %528 = vmatpush1.msra.mxu0 %v150
    %529 = vmatprep.subr.mxu0 0.0
    %530 = vmatpush1.msra.mxu0 %v149
    %531 = vmatprep.subr.mxu0 0.0
    %532 = vmatpush1.msra.mxu0 %v148
    %533 = vmatprep.subr.mxu0 0.0
    %534 = vmatpush1.msra.mxu0 %v147
    %535 = vmatprep.subr.mxu0 0.0
    %536 = vmatpush1.msra.mxu0 %v146
    %537 = vmatprep.subr.mxu0 0.0
    %538 = vmatpush1.msra.mxu0 %v145
    %539 = vmatprep.subr.mxu0 0.0
    %540 = vmatpush1.msra.mxu0 %v144
    %541 = vmatprep.subr.mxu0 0.0
    %542 = vmatpush1.msra.mxu0 %v143
    %543 = vmatprep.subr.mxu0 0.0
    %544 = vmatpush1.msra.mxu0 %v142
    %545 = vmatprep.subr.mxu0 0.0
    %546 = vmatpush2.msra.mxu0 0.0
    %547 = vmatprep.subr.mxu0 0.0
    %548 = vmatpush2.msra.mxu0 0.0
    %549 = vmatprep.subr.mxu0 0.0
    %550 = vmatpush2.msra.mxu0 0.0
    %551 = vmatprep.subr.mxu0 0.0
    %552 = vmatpush2.msra.mxu0 0.0
    %553 = vmatprep.subr.mxu0 0.0
    %554 = vmatpush2.msra.mxu0 0.0
    %555 = vmatprep.subr.mxu0 0.0
    %556 = vmatpush2.msra.mxu0 0.0
    %557 = vmatprep.subr.mxu0 0.0
    %558 = vmatpush2.msra.mxu0 0.0
    %559 = vmatprep.subr.mxu0 0.0
    %560 = vmatpush2.msra.mxu0 0.0
    %561 = vmatprep.subr.mxu0 0.0
    %562 = vmatpush2.msra.mxu0 0.0
    %563 = vmatprep.subr.mxu0 0.0
    %564 = vmatpush2.msra.mxu0 0.0
    %565 = vmatprep.subr.mxu0 0.0
    %566 = vmatpush2.msra.mxu0 0.0
    %567 = vmatprep.subr.mxu0 0.0
    %568 = vmatpush2.msra.mxu0 0.0
    %569 = vmatprep.subr.mxu0 0.0
    %570 = vmatpush2.msra.mxu0 0.0
    %571 = vmatprep.subr.mxu0 0.0
    %572 = vmatpush2.msra.mxu0 0.0
    %573 = vmatprep.subr.mxu0 0.0
    %574 = vmatpush2.msra.mxu0 0.0
    %575 = vmatprep.subr.mxu0 0.0
    %576 = vmatpush2.msra.mxu0 0.0
    %577 = vmatprep.mubr.f32.mxu0 0.0
    %578 = vmatmul.mubr.f32.gmra.mxu0 %v511
    %v579 = vpop.f32.mrf.mxu0
    %v580 = vadd.f32 0.0, %v579
    %v581 = vpop.f32.mrf.mxu0
    %582 = vdwg.mxu0
    %v583 = vld [vmem:[#allocation2 + $0x5] sm:$0x1]
    %v584 = vld [vmem:[#allocation2 + $0xd] sm:$0x1]
    %v586 = vrot.slane %v580, 1
    %v589 = vmul.f32 %v583, %v580
    %v590 = vmul.f32 %v584, %v586
    %v593 = vrot.slane %v590, 7
    %v594 = vsel %vm169, %v593, %v589
    %v595 = vsel %vm139, %v594, 0
    %597 = vmatprep.subr.mxu0 0.0
    %598 = vmatpush1.msra.mxu0 0.0
    %599 = vmatprep.subr.mxu0 0.0
    %600 = vmatpush1.msra.mxu0 0.0
    %601 = vmatprep.subr.mxu0 0.0
    %602 = vmatpush1.msra.mxu0 0.0
    %603 = vmatprep.subr.mxu0 0.0
    %604 = vmatpush1.msra.mxu0 %v175
    %605 = vmatprep.subr.mxu0 0.0
    %606 = vmatpush1.msra.mxu0 %v153
    %607 = vmatprep.subr.mxu0 0.0
    %608 = vmatpush1.msra.mxu0 %v152
    %609 = vmatprep.subr.mxu0 0.0
    %610 = vmatpush1.msra.mxu0 %v151
    %611 = vmatprep.subr.mxu0 0.0
    %612 = vmatpush1.msra.mxu0 %v150
    %613 = vmatprep.subr.mxu0 0.0
    %614 = vmatpush1.msra.mxu0 %v149
    %615 = vmatprep.subr.mxu0 0.0
    %616 = vmatpush1.msra.mxu0 %v148
    %617 = vmatprep.subr.mxu0 0.0
    %618 = vmatpush1.msra.mxu0 %v147
    %619 = vmatprep.subr.mxu0 0.0
    %620 = vmatpush1.msra.mxu0 %v146
    %621 = vmatprep.subr.mxu0 0.0
    %622 = vmatpush1.msra.mxu0 %v145
    %623 = vmatprep.subr.mxu0 0.0
    %624 = vmatpush1.msra.mxu0 %v144
    %625 = vmatprep.subr.mxu0 0.0
    %626 = vmatpush1.msra.mxu0 %v143
    %627 = vmatprep.subr.mxu0 0.0
    %628 = vmatpush1.msra.mxu0 %v142
    %629 = vmatprep.subr.mxu0 0.0
    %630 = vmatpush2.msra.mxu0 0.0
    %631 = vmatprep.subr.mxu0 0.0
    %632 = vmatpush2.msra.mxu0 0.0
    %633 = vmatprep.subr.mxu0 0.0
    %634 = vmatpush2.msra.mxu0 0.0
    %635 = vmatprep.subr.mxu0 0.0
    %636 = vmatpush2.msra.mxu0 0.0
    %637 = vmatprep.subr.mxu0 0.0
    %638 = vmatpush2.msra.mxu0 0.0
    %639 = vmatprep.subr.mxu0 0.0
    %640 = vmatpush2.msra.mxu0 0.0
    %641 = vmatprep.subr.mxu0 0.0
    %642 = vmatpush2.msra.mxu0 0.0
    %643 = vmatprep.subr.mxu0 0.0
    %644 = vmatpush2.msra.mxu0 0.0
    %645 = vmatprep.subr.mxu0 0.0
    %646 = vmatpush2.msra.mxu0 0.0
    %647 = vmatprep.subr.mxu0 0.0
    %648 = vmatpush2.msra.mxu0 0.0
    %649 = vmatprep.subr.mxu0 0.0
    %650 = vmatpush2.msra.mxu0 0.0
    %651 = vmatprep.subr.mxu0 0.0
    %652 = vmatpush2.msra.mxu0 0.0
    %653 = vmatprep.subr.mxu0 0.0
    %654 = vmatpush2.msra.mxu0 0.0
    %655 = vmatprep.subr.mxu0 0.0
    %656 = vmatpush2.msra.mxu0 0.0
    %657 = vmatprep.subr.mxu0 0.0
    %658 = vmatpush2.msra.mxu0 0.0
    %659 = vmatprep.subr.mxu0 0.0
    %660 = vmatpush2.msra.mxu0 0.0
    %661 = vmatprep.mubr.f32.mxu0 0.0
    %662 = vmatmul.mubr.f32.gmra.mxu0 %v595
    %v663 = vpop.f32.mrf.mxu0
    %v664 = vadd.f32 0.0, %v663
    %v665 = vpop.f32.mrf.mxu0
    %666 = vdwg.mxu0
    %v667 = vld [vmem:[#allocation2 + $0x6] sm:$0x1]
    %v668 = vld [vmem:[#allocation2 + $0xe] sm:$0x1]
    %v670 = vrot.slane %v664, 1
    %v673 = vmul.f32 %v667, %v664
    %v674 = vmul.f32 %v668, %v670
    %v677 = vrot.slane %v674, 7
    %v678 = vsel %vm169, %v677, %v673
    %v679 = vsel %vm139, %v678, 0
    %681 = vmatprep.subr.mxu0 0.0
    %682 = vmatpush1.msra.mxu0 0.0
    %683 = vmatprep.subr.mxu0 0.0
    %684 = vmatpush1.msra.mxu0 0.0
    %685 = vmatprep.subr.mxu0 0.0
    %686 = vmatpush1.msra.mxu0 0.0
    %687 = vmatprep.subr.mxu0 0.0
    %688 = vmatpush1.msra.mxu0 %v175
    %689 = vmatprep.subr.mxu0 0.0
    %690 = vmatpush1.msra.mxu0 %v153
    %691 = vmatprep.subr.mxu0 0.0
    %692 = vmatpush1.msra.mxu0 %v152
    %693 = vmatprep.subr.mxu0 0.0
    %694 = vmatpush1.msra.mxu0 %v151
    %695 = vmatprep.subr.mxu0 0.0
    %696 = vmatpush1.msra.mxu0 %v150
    %697 = vmatprep.subr.mxu0 0.0
    %698 = vmatpush1.msra.mxu0 %v149
    %699 = vmatprep.subr.mxu0 0.0
    %700 = vmatpush1.msra.mxu0 %v148
    %701 = vmatprep.subr.mxu0 0.0
    %702 = vmatpush1.msra.mxu0 %v147
    %703 = vmatprep.subr.mxu0 0.0
    %704 = vmatpush1.msra.mxu0 %v146
    %705 = vmatprep.subr.mxu0 0.0
    %706 = vmatpush1.msra.mxu0 %v145
    %707 = vmatprep.subr.mxu0 0.0
    %708 = vmatpush1.msra.mxu0 %v144
    %709 = vmatprep.subr.mxu0 0.0
    %710 = vmatpush1.msra.mxu0 %v143
    %711 = vmatprep.subr.mxu0 0.0
    %712 = vmatpush1.msra.mxu0 %v142
    %713 = vmatprep.subr.mxu0 0.0
    %714 = vmatpush2.msra.mxu0 0.0
    %715 = vmatprep.subr.mxu0 0.0
    %716 = vmatpush2.msra.mxu0 0.0
    %717 = vmatprep.subr.mxu0 0.0
    %718 = vmatpush2.msra.mxu0 0.0
    %719 = vmatprep.subr.mxu0 0.0
    %720 = vmatpush2.msra.mxu0 0.0
    %721 = vmatprep.subr.mxu0 0.0
    %722 = vmatpush2.msra.mxu0 0.0
    %723 = vmatprep.subr.mxu0 0.0
    %724 = vmatpush2.msra.mxu0 0.0
    %725 = vmatprep.subr.mxu0 0.0
    %726 = vmatpush2.msra.mxu0 0.0
    %727 = vmatprep.subr.mxu0 0.0
    %728 = vmatpush2.msra.mxu0 0.0
    %729 = vmatprep.subr.mxu0 0.0
    %730 = vmatpush2.msra.mxu0 0.0
    %731 = vmatprep.subr.mxu0 0.0
    %732 = vmatpush2.msra.mxu0 0.0
    %733 = vmatprep.subr.mxu0 0.0
    %734 = vmatpush2.msra.mxu0 0.0
    %735 = vmatprep.subr.mxu0 0.0
    %736 = vmatpush2.msra.mxu0 0.0
    %737 = vmatprep.subr.mxu0 0.0
    %738 = vmatpush2.msra.mxu0 0.0
    %739 = vmatprep.subr.mxu0 0.0
    %740 = vmatpush2.msra.mxu0 0.0
    %741 = vmatprep.subr.mxu0 0.0
    %742 = vmatpush2.msra.mxu0 0.0
    %743 = vmatprep.subr.mxu0 0.0
    %744 = vmatpush2.msra.mxu0 0.0
    %745 = vmatprep.mubr.f32.mxu0 0.0
    %746 = vmatmul.mubr.f32.gmra.mxu0 %v679
    %v747 = vpop.f32.mrf.mxu0
    %v748 = vadd.f32 0.0, %v747
    %v749 = vpop.f32.mrf.mxu0
    %750 = vdwg.mxu0
    %v751 = vld [vmem:[#allocation2 + $0x7] sm:$0x1]
    %v752 = vld [vmem:[#allocation2 + $0xf] sm:$0x1]
    %v754 = vrot.slane %v748, 1
    %v757 = vmul.f32 %v751, %v748
    %v758 = vmul.f32 %v752, %v754
    %v759 = vld [vmem:[%s4] sm:$0xff]
    %v760 = vld [vmem:[%s4 + $0x8] sm:$0xff]
    %v761 = vld [vmem:[%s4 + $0x10] sm:$0xff]
    %v762 = vld [vmem:[%s4 + $0x18] sm:$0xff]
    %v763 = vld [vmem:[%s4 + $0x20] sm:$0xff]
    %v764 = vld [vmem:[%s4 + $0x28] sm:$0xff]
    %v765 = vld [vmem:[%s4 + $0x30] sm:$0xff]
    %v766 = vld [vmem:[%s4 + $0x38] sm:$0xff]
    %v767 = vld [vmem:[%s4 + $0x40] sm:$0xff]
    %v768 = vld [vmem:[%s4 + $0x48] sm:$0xff]
    %v769 = vld [vmem:[%s4 + $0x50] sm:$0xff]
    %v770 = vld [vmem:[%s4 + $0x58] sm:$0xff]
    %v771 = vld [vmem:[%s4 + $0x60] sm:$0xf]
    %v774 = vrot.slane %v758, 7
    %v775 = vsel %vm169, %v774, %v757
    %v776 = vsel %vm139, %v775, 0
    %v779 = vsel %vm173, %v771, 0
    %781 = vmatprep.subr.mxu0 0.0
    %782 = vmatpush1.msra.mxu0 0.0
    %783 = vmatprep.subr.mxu0 0.0
    %784 = vmatpush1.msra.mxu0 0.0
    %785 = vmatprep.subr.mxu0 0.0
    %786 = vmatpush1.msra.mxu0 0.0
    %787 = vmatprep.subr.mxu0 0.0
    %788 = vmatpush1.msra.mxu0 %v779
    %789 = vmatprep.subr.mxu0 0.0
    %790 = vmatpush1.msra.mxu0 %v770
    %791 = vmatprep.subr.mxu0 0.0
    %792 = vmatpush1.msra.mxu0 %v769
    %793 = vmatprep.subr.mxu0 0.0
    %794 = vmatpush1.msra.mxu0 %v768
    %795 = vmatprep.subr.mxu0 0.0
    %796 = vmatpush1.msra.mxu0 %v767
    %797 = vmatprep.subr.mxu0 0.0
    %798 = vmatpush1.msra.mxu0 %v766
    %799 = vmatprep.subr.mxu0 0.0
    %800 = vmatpush1.msra.mxu0 %v765
    %801 = vmatprep.subr.mxu0 0.0
    %802 = vmatpush1.msra.mxu0 %v764
    %803 = vmatprep.subr.mxu0 0.0
    %804 = vmatpush1.msra.mxu0 %v763
    %805 = vmatprep.subr.mxu0 0.0
    %806 = vmatpush1.msra.mxu0 %v762
    %807 = vmatprep.subr.mxu0 0.0
    %808 = vmatpush1.msra.mxu0 %v761
    %809 = vmatprep.subr.mxu0 0.0
    %810 = vmatpush1.msra.mxu0 %v760
    %811 = vmatprep.subr.mxu0 0.0
    %812 = vmatpush1.msra.mxu0 %v759
    %813 = vmatprep.subr.mxu0 0.0
    %814 = vmatpush2.msra.mxu0 0.0
    %815 = vmatprep.subr.mxu0 0.0
    %816 = vmatpush2.msra.mxu0 0.0
    %817 = vmatprep.subr.mxu0 0.0
    %818 = vmatpush2.msra.mxu0 0.0
    %819 = vmatprep.subr.mxu0 0.0
    %820 = vmatpush2.msra.mxu0 0.0
    %821 = vmatprep.subr.mxu0 0.0
    %822 = vmatpush2.msra.mxu0 0.0
    %823 = vmatprep.subr.mxu0 0.0
    %824 = vmatpush2.msra.mxu0 0.0
    %825 = vmatprep.subr.mxu0 0.0
    %826 = vmatpush2.msra.mxu0 0.0
    %827 = vmatprep.subr.mxu0 0.0
    %828 = vmatpush2.msra.mxu0 0.0
    %829 = vmatprep.subr.mxu0 0.0
    %830 = vmatpush2.msra.mxu0 0.0
    %831 = vmatprep.subr.mxu0 0.0
    %832 = vmatpush2.msra.mxu0 0.0
    %833 = vmatprep.subr.mxu0 0.0
    %834 = vmatpush2.msra.mxu0 0.0
    %835 = vmatprep.subr.mxu0 0.0
    %836 = vmatpush2.msra.mxu0 0.0
    %837 = vmatprep.subr.mxu0 0.0
    %838 = vmatpush2.msra.mxu0 0.0
    %839 = vmatprep.subr.mxu0 0.0
    %840 = vmatpush2.msra.mxu0 0.0
    %841 = vmatprep.subr.mxu0 0.0
    %842 = vmatpush2.msra.mxu0 0.0
    %843 = vmatprep.subr.mxu0 0.0
    %844 = vmatpush2.msra.mxu0 0.0
    %845 = vmatprep.mubr.f32.mxu0 0.0
    %846 = vmatmul.mubr.f32.gmra.mxu0 %v776
    %v847 = vpop.f32.mrf.mxu0
    %v848 = vadd.f32 0.0, %v847
    %v849 = vpop.f32.mrf.mxu0
    %850 = vdwg.mxu0
    %vm851 = vcmask 9216
    %852 = vst.msk [vmem:[#allocation8] sm:$0x3] %vm851, %v848
    // Predicated region
    $region30: #{tpu_custom_call.1} parent=1 // pred_check
      _
    $region31: #{tpu_custom_call.1} parent=1 // pred_check_branch
      %854 = sbr.rel (0) target = $region33
    $region32: #{tpu_custom_call.1} parent=1 // pred_region
      %s856 = ssub.s32 32, 32
      %857 = vsyncadd [#allocation5], %s856
      %s859 = sshll.u32 [#allocation8], 4
      %s860 = int_to_ptr.vmem [resolvable:$true] %s859
      %862 = dma.vmem_to_hbm [thread:$0]  %s860, 32, %s5, [#allocation5]
    $region33: #{tpu_custom_call.1} parent=1 // pred_fallthru
      _
    // Predicated region
    $region34: #{tpu_custom_call.1} parent=1 // pred_check
      _
    $region35: #{tpu_custom_call.1} parent=1 // pred_check_branch
      %864 = sbr.rel (0) target = $region37
    $region36: #{tpu_custom_call.1} parent=1 // pred_region
      %865 = dma.done [#allocation5], 32
    $region37: #{tpu_custom_call.1} parent=1 // pred_fallthru
      _
    %866 = vsyncpa [#allocation4], 1
    %867 = vsyncpa [#allocation7], 1
    %868 = vsyncpa [#allocation5], 1

</llo_original>
